<compile_context>
chip_gen: v6e
topology: v6e:2x2x1
jax: 0.10.0
libtpu: 0.0.40
codegen_flags: <defaults>
</compile_context>

<pallas_src>
import functools

import jax
import jax.numpy as jnp
from jax.experimental import pallas as pl
from jax.experimental.pallas import tpu as pltpu


def _burst_sse_kernel(burst_ref, ave_ref, gt_ref,
                      burst_out_ref, ave_out_ref, acc_ref, *, nf):
    # burst_ref: (nf, tr, 128)   nf frames of batch b, R-tile r (batch squeezed)
    # ave_ref / gt_ref: (tr, 128) resident across the frame-step axis for (b, r)
    # burst_out_ref / ave_out_ref: (1, 128) per-(b, r) partial SSE slabs
    # acc_ref: (tr, 128) f32 VMEM accumulator (VPU-only updates per step)
    n = pl.program_id(2)
    gt = gt_ref[...].astype(jnp.float32)

    @pl.when(n == 0)
    def _init():
        acc_ref[...] = jnp.zeros_like(acc_ref)
        da = ave_ref[...].astype(jnp.float32) - gt
        # Written once per (b, r) tile; the output block stays VMEM-resident
        # across the (arbitrary) frame-step axis, so it is not clobbered later.
        ave_out_ref[...] = jnp.sum(da * da, axis=0, keepdims=True)

    # nf-frame unrolled VPU accumulate; hidden under the next block's DMA.
    part = None
    for f in range(nf):
        db = burst_ref[f].astype(jnp.float32) - gt
        sq = db * db
        part = sq if part is None else part + sq
    acc_ref[...] += part

    @pl.when(n == pl.num_programs(2) - 1)
    def _finish():
        # Single cross-sublane (XLU) reduce per (b, r) tile, not per step.
        burst_out_ref[...] = jnp.sum(acc_ref[...], axis=0, keepdims=True)


def _sublane_packing(*dtypes):
    """Native sublane packing: 8 for 4-byte, 16 for 2-byte, 32 for 1-byte dtypes."""
    sub = 8
    for dt in dtypes:
        sub = max(sub, 32 // max(1, jnp.dtype(dt).itemsize))
    return sub


def _round_up(x, m):
    return ((x + m - 1) // m) * m


def _pick_frames_per_step(n, target=8):
    """Largest divisor of n that is <= target (frames folded into one grid step)."""
    for nf in range(min(n, target), 0, -1):
        if n % nf == 0:
            return nf
    return 1


def burst_rec_loss(burst, burst_ave, ground_truth, global_step,
                   coeff_ave=1.0, coeff_burst=100.0, alpha=0.9998):
    """Pallas implementation of BurstRecLoss.forward.

    burst:        [B, N, C, H, W]
    burst_ave:    [B, C, H, W]
    ground_truth: [B, C, H, W]
    global_step:  python int or traced scalar
    returns (loss_ave, loss_burst) as float32 scalars.
    """
    B, N, C, H, W = burst.shape
    frame_elems = C * H * W

    sub = _sublane_packing(burst.dtype, burst_ave.dtype, ground_truth.dtype)
    # Rows of 128 lanes per frame, padded up to a whole number of aligned tiles.
    R = pl.cdiv(frame_elems, 128)
    TR_TARGET = 512                      # multiple of 32 -> aligned for all dtypes
    if R <= TR_TARGET:
        tr = _round_up(R, sub)
        RT = 1
    else:
        tr = TR_TARGET
        RT = pl.cdiv(R, tr)
    padded_R = RT * tr
    padded_elems = padded_R * 128
    nf = _pick_frames_per_step(N, target=8)

    # Contiguous (free) reshapes; zero-pad the flattened frame axis when needed.
    # Padded positions are 0 in burst, burst_ave and ground_truth, so they add
    # exactly 0 to both sums of squared errors.
    burst_flat = burst.reshape(B, N, frame_elems)
    ave_flat = burst_ave.reshape(B, frame_elems)
    gt_flat = ground_truth.reshape(B, frame_elems)
    pad = padded_elems - frame_elems
    if pad:
        burst_flat = jnp.pad(burst_flat, ((0, 0), (0, 0), (0, pad)))
        ave_flat = jnp.pad(ave_flat, ((0, 0), (0, pad)))
        gt_flat = jnp.pad(gt_flat, ((0, 0), (0, pad)))
    burst_f = burst_flat.reshape(B, N, padded_R, 128)
    ave_f = ave_flat.reshape(B, padded_R, 128)
    gt_f = gt_flat.reshape(B, padded_R, 128)

    grid = (B, RT, N // nf)  # frame-step axis innermost -> gt/ave stay resident

    out_shape = (jax.ShapeDtypeStruct((B, RT, 1, 128), jnp.float32),
                 jax.ShapeDtypeStruct((B, RT, 1, 128), jnp.float32))

    bytes_accessed = (burst.size * burst.dtype.itemsize
                      + burst_ave.size * burst_ave.dtype.itemsize
                      + ground_truth.size * ground_truth.dtype.itemsize
                      + 2 * B * RT * 128 * 4)
    cost = pl.CostEstimate(flops=3 * (burst.size + burst_ave.size),
                           transcendentals=0,
                           bytes_accessed=bytes_accessed)

    kernel = functools.partial(_burst_sse_kernel, nf=nf)

    def _call(burst_pipeline_mode):
        burst_spec_kwargs = {}
        if burst_pipeline_mode is not None:
            burst_spec_kwargs["pipeline_mode"] = burst_pipeline_mode
        grid_spec = pltpu.PrefetchScalarGridSpec(
            num_scalar_prefetch=0,
            grid=grid,
            in_specs=[
                # nf frames of batch b, R-tile r: the only per-step re-fetch.
                pl.BlockSpec((None, nf, tr, 128),
                             lambda b, r, n: (b, n, r, 0),
                             **burst_spec_kwargs),
                # burst_ave tile (re-DMA'd only when (b, r) changes)
                pl.BlockSpec((None, tr, 128), lambda b, r, n: (b, r, 0)),
                # ground-truth tile (re-DMA'd only when (b, r) changes)
                pl.BlockSpec((None, tr, 128), lambda b, r, n: (b, r, 0)),
            ],
            out_specs=(
                pl.BlockSpec((None, None, 1, 128), lambda b, r, n: (b, r, 0, 0)),
                pl.BlockSpec((None, None, 1, 128), lambda b, r, n: (b, r, 0, 0)),
            ),
            scratch_shapes=[pltpu.VMEM((tr, 128), jnp.float32)],
        )
        return pl.pallas_call(
            kernel,
            out_shape=out_shape,
            grid_spec=grid_spec,
            cost_estimate=cost,
            compiler_params=pltpu.CompilerParams(
                # Per-(b, r) partial outputs -> B and R-tile axes are race-free
                # "parallel" (megacore on v7x); frame-step axis accumulates.
                dimension_semantics=("parallel", "parallel", "arbitrary")),
        )(burst_f, ave_f, gt_f)

    try:
        # Triple-buffer the hot (per-step) burst input; ~one extra block of VMEM.
        burst_part, ave_part = _call(pl.Buffered(3))
    except Exception:
        # pipeline_mode not supported by this Pallas build -> default 2-deep.
        burst_part, ave_part = _call(None)

    denom = jnp.float32(B * frame_elems)
    loss_ave = jnp.float32(coeff_ave) * (jnp.sum(ave_part) / denom)

    if isinstance(global_step, (int, float)):
        decay = jnp.float32(alpha ** int(global_step))
    else:
        decay = jnp.power(jnp.float32(alpha), jnp.asarray(global_step, jnp.float32))
    loss_burst = (jnp.float32(coeff_burst) * decay
                  * (jnp.sum(burst_part) / (jnp.float32(N) * denom)))

    # TODO(synk): TensorGradient / L1-gradient term is never exercised because
    # BurstRecLoss fixes use_tensor_grad=False; intentionally not implemented.
    # NOTE: when B*RT == 1 (single batch, tiny frame) one v7x TensorCore idles;
    # the workload is microseconds in that regime, so no extra N-split is added.
    return loss_ave, loss_burst


def _reference(burst, burst_ave, ground_truth, global_step,
               coeff_ave=1.0, coeff_burst=100.0, alpha=0.9998):
    mse = lambda a, b: jnp.mean((a.astype(jnp.float32) - b.astype(jnp.float32)) ** 2)
    loss_ave = coeff_ave * mse(burst_ave, ground_truth)
    N = burst.shape[1]
    loss_burst = sum(mse(burst[:, i], ground_truth) for i in range(N)) / N
    loss_burst = loss_burst * (alpha ** int(global_step)) * coeff_burst
    return loss_ave, loss_burst


if __name__ == "__main__":
    key = jax.random.PRNGKey(0)
    B, N, C, H, W = 2, 16, 3, 16, 16      # N=16 -> nf=8, two frame-steps per tile
    k1, k2, k3 = jax.random.split(key, 3)
    burst = jax.random.normal(k1, (B, N, C, H, W), dtype=jnp.float32)
    ground_truth = jax.random.normal(k2, (B, C, H, W), dtype=jnp.float32)
    burst_ave = jnp.mean(burst, axis=1) + 0.01 * jax.random.normal(
        k3, (B, C, H, W), dtype=jnp.float32)
    global_step = 100

    loss_ave, loss_burst = burst_rec_loss(burst, burst_ave, ground_truth, global_step)
    jax.block_until_ready((loss_ave, loss_burst))

    ref_ave, ref_burst = _reference(burst, burst_ave, ground_truth, global_step)
    assert jnp.allclose(loss_ave, ref_ave, rtol=1e-5, atol=1e-6), (loss_ave, ref_ave)
    assert jnp.allclose(loss_burst, ref_burst, rtol=1e-5, atol=1e-5), (loss_burst, ref_burst)

    print("KERNEL_OK")
</pallas_src>

<mosaic_0001>
module attributes {stable_mosaic.version = 11 : i64} {
  func.func @_burst_sse_kernel(%arg0: i32, %arg1: i32, %arg2: i32, %arg3: memref<1x8x8x128xf32, #tpu.memory_space<vmem>>, %arg4: memref<1x8x128xf32, #tpu.memory_space<vmem>>, %arg5: memref<1x8x128xf32, #tpu.memory_space<vmem>>, %arg6: memref<1x1x1x128xf32, #tpu.memory_space<vmem>>, %arg7: memref<1x1x1x128xf32, #tpu.memory_space<vmem>>, %arg8: memref<8x128xf32, #tpu.memory_space<vmem>>) attributes {dimension_semantics = [#tpu.dimension_semantics<parallel>, #tpu.dimension_semantics<parallel>, #tpu.dimension_semantics<arbitrary>], iteration_bounds = array<i64: 2, 1, 2>, scalar_prefetch = 0 : i64, scratch_operands = 1 : i64, tpu.core_type = #tpu.core_type<tc>, window_params = [{transform_indices = @transform_0, window_bounds = array<i64: 1, 8, 8, 128>}, {transform_indices = @transform_1, window_bounds = array<i64: 1, 8, 128>}, {transform_indices = @transform_2, window_bounds = array<i64: 1, 8, 128>}, {transform_indices = @transform_3, window_bounds = array<i64: 1, 1, 1, 128>}, {transform_indices = @transform_4, window_bounds = array<i64: 1, 1, 1, 128>}]} {
    %c0 = arith.constant 0 : index
    %c0_0 = arith.constant 0 : index
    %c0_1 = arith.constant 0 : index
    %0 = vector.load %arg5[%c0, %c0_0, %c0_1] : memref<1x8x128xf32, #tpu.memory_space<vmem>>, vector<1x8x128xf32>
    %1 = vector.shape_cast %0 : vector<1x8x128xf32> to vector<8x128xf32>
    %c0_i32 = arith.constant 0 : i32
    %2 = arith.cmpi eq, %arg2, %c0_i32 : i32
    %3 = arith.extui %2 : i1 to i32
    %c0_i32_2 = arith.constant 0 : i32
    %4 = arith.cmpi ne, %3, %c0_i32_2 : i32
    scf.if %4 {
      %cst = arith.constant 0.000000e+00 : f32
      %50 = vector.broadcast %cst : f32 to vector<8x128xf32>
      %c0_33 = arith.constant 0 : index
      %c0_34 = arith.constant 0 : index
      %51 = vector.load %arg8[%c0_33, %c0_34] : memref<8x128xf32, #tpu.memory_space<vmem>>, vector<8x128xf32>
      tpu.vector_store %arg8[%c0_33, %c0_34], %50 {strides = array<i32>} : memref<8x128xf32, #tpu.memory_space<vmem>>, vector<8x128xf32>,
      %c0_35 = arith.constant 0 : index
      %c0_36 = arith.constant 0 : index
      %c0_37 = arith.constant 0 : index
      %52 = vector.load %arg4[%c0_35, %c0_36, %c0_37] : memref<1x8x128xf32, #tpu.memory_space<vmem>>, vector<1x8x128xf32>
      %53 = vector.shape_cast %52 : vector<1x8x128xf32> to vector<8x128xf32>
      %54 = arith.subf %53, %1 : vector<8x128xf32>
      %55 = arith.mulf %54, %54 : vector<8x128xf32>
      %cst_38 = arith.constant dense<0.000000e+00> : vector<128xf32>
      %56 = vector.multi_reduction <add>, %55, %cst_38 [0] : vector<8x128xf32> to vector<128xf32>
      %57 = vector.shape_cast %56 : vector<128xf32> to vector<1x128xf32>
      %c0_39 = arith.constant 0 : index
      %c0_40 = arith.constant 0 : index
      %c0_41 = arith.constant 0 : index
      %c0_42 = arith.constant 0 : index
      %58 = vector.load %arg7[%c0_39, %c0_40, %c0_41, %c0_42] : memref<1x1x1x128xf32, #tpu.memory_space<vmem>>, vector<1x1x1x128xf32>
      %59 = vector.shape_cast %58 : vector<1x1x1x128xf32> to vector<1x128xf32>
      %60 = vector.shape_cast %57 : vector<1x128xf32> to vector<1x1x1x128xf32>
      tpu.vector_store %arg7[%c0_39, %c0_40, %c0_41, %c0_42], %60 {strides = array<i32>} : memref<1x1x1x128xf32, #tpu.memory_space<vmem>>, vector<1x1x1x128xf32>,
    } else {
    }
    %c0_3 = arith.constant 0 : index
    %c0_4 = arith.constant 0 : index
    %c0_5 = arith.constant 0 : index
    %c0_6 = arith.constant 0 : index
    %5 = vector.load %arg3[%c0_3, %c0_4, %c0_5, %c0_6] : memref<1x8x8x128xf32, #tpu.memory_space<vmem>>, vector<1x1x8x128xf32>
    %6 = vector.shape_cast %5 : vector<1x1x8x128xf32> to vector<8x128xf32>
    %7 = arith.subf %6, %1 : vector<8x128xf32>
    %8 = arith.mulf %7, %7 : vector<8x128xf32>
    %c0_7 = arith.constant 0 : index
    %c1 = arith.constant 1 : index
    %c0_8 = arith.constant 0 : index
    %c0_9 = arith.constant 0 : index
    %9 = vector.load %arg3[%c0_7, %c1, %c0_8, %c0_9] : memref<1x8x8x128xf32, #tpu.memory_space<vmem>>, vector<1x1x8x128xf32>
    %10 = vector.shape_cast %9 : vector<1x1x8x128xf32> to vector<8x128xf32>
    %11 = arith.subf %10, %1 : vector<8x128xf32>
    %12 = arith.mulf %11, %11 : vector<8x128xf32>
    %13 = arith.addf %8, %12 : vector<8x128xf32>
    %c0_10 = arith.constant 0 : index
    %c2 = arith.constant 2 : index
    %c0_11 = arith.constant 0 : index
    %c0_12 = arith.constant 0 : index
    %14 = vector.load %arg3[%c0_10, %c2, %c0_11, %c0_12] : memref<1x8x8x128xf32, #tpu.memory_space<vmem>>, vector<1x1x8x128xf32>
    %15 = vector.shape_cast %14 : vector<1x1x8x128xf32> to vector<8x128xf32>
    %16 = arith.subf %15, %1 : vector<8x128xf32>
    %17 = arith.mulf %16, %16 : vector<8x128xf32>
    %18 = arith.addf %13, %17 : vector<8x128xf32>
    %c0_13 = arith.constant 0 : index
    %c3 = arith.constant 3 : index
    %c0_14 = arith.constant 0 : index
    %c0_15 = arith.constant 0 : index
    %19 = vector.load %arg3[%c0_13, %c3, %c0_14, %c0_15] : memref<1x8x8x128xf32, #tpu.memory_space<vmem>>, vector<1x1x8x128xf32>
    %20 = vector.shape_cast %19 : vector<1x1x8x128xf32> to vector<8x128xf32>
    %21 = arith.subf %20, %1 : vector<8x128xf32>
    %22 = arith.mulf %21, %21 : vector<8x128xf32>
    %23 = arith.addf %18, %22 : vector<8x128xf32>
    %c0_16 = arith.constant 0 : index
    %c4 = arith.constant 4 : index
    %c0_17 = arith.constant 0 : index
    %c0_18 = arith.constant 0 : index
    %24 = vector.load %arg3[%c0_16, %c4, %c0_17, %c0_18] : memref<1x8x8x128xf32, #tpu.memory_space<vmem>>, vector<1x1x8x128xf32>
    %25 = vector.shape_cast %24 : vector<1x1x8x128xf32> to vector<8x128xf32>
    %26 = arith.subf %25, %1 : vector<8x128xf32>
    %27 = arith.mulf %26, %26 : vector<8x128xf32>
    %28 = arith.addf %23, %27 : vector<8x128xf32>
    %c0_19 = arith.constant 0 : index
    %c5 = arith.constant 5 : index
    %c0_20 = arith.constant 0 : index
    %c0_21 = arith.constant 0 : index
    %29 = vector.load %arg3[%c0_19, %c5, %c0_20, %c0_21] : memref<1x8x8x128xf32, #tpu.memory_space<vmem>>, vector<1x1x8x128xf32>
    %30 = vector.shape_cast %29 : vector<1x1x8x128xf32> to vector<8x128xf32>
    %31 = arith.subf %30, %1 : vector<8x128xf32>
    %32 = arith.mulf %31, %31 : vector<8x128xf32>
    %33 = arith.addf %28, %32 : vector<8x128xf32>
    %c0_22 = arith.constant 0 : index
    %c6 = arith.constant 6 : index
    %c0_23 = arith.constant 0 : index
    %c0_24 = arith.constant 0 : index
    %34 = vector.load %arg3[%c0_22, %c6, %c0_23, %c0_24] : memref<1x8x8x128xf32, #tpu.memory_space<vmem>>, vector<1x1x8x128xf32>
    %35 = vector.shape_cast %34 : vector<1x1x8x128xf32> to vector<8x128xf32>
    %36 = arith.subf %35, %1 : vector<8x128xf32>
    %37 = arith.mulf %36, %36 : vector<8x128xf32>
    %38 = arith.addf %33, %37 : vector<8x128xf32>
    %c0_25 = arith.constant 0 : index
    %c7 = arith.constant 7 : index
    %c0_26 = arith.constant 0 : index
    %c0_27 = arith.constant 0 : index
    %39 = vector.load %arg3[%c0_25, %c7, %c0_26, %c0_27] : memref<1x8x8x128xf32, #tpu.memory_space<vmem>>, vector<1x1x8x128xf32>
    %40 = vector.shape_cast %39 : vector<1x1x8x128xf32> to vector<8x128xf32>
    %41 = arith.subf %40, %1 : vector<8x128xf32>
    %42 = arith.mulf %41, %41 : vector<8x128xf32>
    %43 = arith.addf %38, %42 : vector<8x128xf32>
    %c0_28 = arith.constant 0 : index
    %c0_29 = arith.constant 0 : index
    %44 = vector.load %arg8[%c0_28, %c0_29] : memref<8x128xf32, #tpu.memory_space<vmem>>, vector<8x128xf32>
    %45 = arith.addf %44, %43 : vector<8x128xf32>
    %c0_30 = arith.constant 0 : index
    %c0_31 = arith.constant 0 : index
    %46 = vector.load %arg8[%c0_30, %c0_31] : memref<8x128xf32, #tpu.memory_space<vmem>>, vector<8x128xf32>
    tpu.vector_store %arg8[%c0_30, %c0_31], %45 {strides = array<i32>} : memref<8x128xf32, #tpu.memory_space<vmem>>, vector<8x128xf32>,
    %c1_i32 = arith.constant 1 : i32
    %47 = arith.cmpi eq, %arg2, %c1_i32 : i32
    %48 = arith.extui %47 : i1 to i32
    %c0_i32_32 = arith.constant 0 : i32
    %49 = arith.cmpi ne, %48, %c0_i32_32 : i32
    scf.if %49 {
      %c0_33 = arith.constant 0 : index
      %c0_34 = arith.constant 0 : index
      %50 = vector.load %arg8[%c0_33, %c0_34] : memref<8x128xf32, #tpu.memory_space<vmem>>, vector<8x128xf32>
      %cst = arith.constant dense<0.000000e+00> : vector<128xf32>
      %51 = vector.multi_reduction <add>, %50, %cst [0] : vector<8x128xf32> to vector<128xf32>
      %52 = vector.shape_cast %51 : vector<128xf32> to vector<1x128xf32>
      %c0_35 = arith.constant 0 : index
      %c0_36 = arith.constant 0 : index
      %c0_37 = arith.constant 0 : index
      %c0_38 = arith.constant 0 : index
      %53 = vector.load %arg6[%c0_35, %c0_36, %c0_37, %c0_38] : memref<1x1x1x128xf32, #tpu.memory_space<vmem>>, vector<1x1x1x128xf32>
      %54 = vector.shape_cast %53 : vector<1x1x1x128xf32> to vector<1x128xf32>
      %55 = vector.shape_cast %52 : vector<1x128xf32> to vector<1x1x1x128xf32>
      tpu.vector_store %arg6[%c0_35, %c0_36, %c0_37, %c0_38], %55 {strides = array<i32>} : memref<1x1x1x128xf32, #tpu.memory_space<vmem>>, vector<1x1x1x128xf32>,
    } else {
    }
    return
  }
  func.func @transform_0(%arg0: i32, %arg1: i32, %arg2: i32) -> (i32, i32, i32, i32) {
    %c0_i32 = arith.constant 0 : i32
    %c0_i32_0 = arith.constant 0 : i32
    return %arg0, %arg2, %arg1, %c0_i32 : i32, i32, i32, i32
  }
  func.func @transform_1(%arg0: i32, %arg1: i32, %arg2: i32) -> (i32, i32, i32) {
    %c0_i32 = arith.constant 0 : i32
    %c0_i32_0 = arith.constant 0 : i32
    return %arg0, %arg1, %c0_i32 : i32, i32, i32
  }
  func.func @transform_2(%arg0: i32, %arg1: i32, %arg2: i32) -> (i32, i32, i32) {
    %c0_i32 = arith.constant 0 : i32
    %c0_i32_0 = arith.constant 0 : i32
    return %arg0, %arg1, %c0_i32 : i32, i32, i32
  }
  func.func @transform_3(%arg0: i32, %arg1: i32, %arg2: i32) -> (i32, i32, i32, i32) {
    %c0_i32 = arith.constant 0 : i32
    %c0_i32_0 = arith.constant 0 : i32
    %c0_i32_1 = arith.constant 0 : i32
    return %arg0, %arg1, %c0_i32, %c0_i32_0 : i32, i32, i32, i32
  }
  func.func @transform_4(%arg0: i32, %arg1: i32, %arg2: i32) -> (i32, i32, i32, i32) {
    %c0_i32 = arith.constant 0 : i32
    %c0_i32_0 = arith.constant 0 : i32
    %c0_i32_1 = arith.constant 0 : i32
    return %arg0, %arg1, %c0_i32, %c0_i32_0 : i32, i32, i32, i32
  }
}

</mosaic_0001>

<llo_original>
// kernel: tpu_custom_call.1
$region0: #{tpu_custom_call.1}
  #allocation0 [shape = 'u32[]', space=smem, size = 0x4, offset = 0x4, fixed_abs, tag = 'smem constant byte address 0x4 - core index']
  #allocation1 [shape = 'u32[144,128]{1,0:T(1,128)}', space=vmem, size = 0x12000, scoped, tag = 'internal scratch']
  #allocation2 [shape = 'f32[8,128]{1,0:T(8,128)}', space=vmem, size = 0x1000, scoped, tag = 'scratch operand']
  %s0 = inlined_call_operand.hbm [shape: f32[2,16,8,128], index: 0, kind: input, shape index: {}]
  %s1 = inlined_call_operand.hbm [shape: f32[2,8,128], index: 1, kind: input, shape index: {}]
  %s2 = inlined_call_operand.hbm [shape: f32[2,8,128], index: 2, kind: input, shape index: {}]
  %s3 = inlined_call_operand.hbm [shape: f32[2,1,1,128], index: 3, kind: output, shape index: {0}]
  %s4 = inlined_call_operand.hbm [shape: f32[2,1,1,128], index: 4, kind: output, shape index: {1}]
  %5 = xla_tuple %s3, %s4
  %s6 = sld [smem:[#allocation0]]
  $region73: #{tpu_custom_call.1} parent=0
    _
  %s8 = ssub.s32 1, %s6
  %s9 = scalar_select 0, %s8, %s6
  $region1: #{tpu_custom_call.1} parent=0
    #allocation3 [shape = 'u8[65536]{0}', space=vmem, size = 0x10000, scoped, tag = 'input window, operand 0']
    #allocation4 [shape = 's32[2]{0}', space=sflag, size = 0x8, scoped, tag = 'scoped memory for tpu_custom_call.1']
    #allocation5 [shape = 's32[2]{0}', space=sflag, size = 0x8, scoped, tag = 'scoped memory for tpu_custom_call.1']
    #allocation6 [shape = 'u8[8192]{0}', space=vmem, size = 0x2000, scoped, tag = 'input window, operand 1']
    #allocation7 [shape = 's32[2]{0}', space=sflag, size = 0x8, scoped, tag = 'scoped memory for tpu_custom_call.1']
    #allocation8 [shape = 'u8[8192]{0}', space=vmem, size = 0x2000, scoped, tag = 'input window, operand 2']
    #allocation9 [shape = 'u8[1024]{0}', space=vmem, size = 0x400, scoped, tag = 'output window, operand 0']
    #allocation10 [shape = 'u8[1024]{0}', space=vmem, size = 0x400, scoped, tag = 'output window, operand 1']
    #allocation11 [shape = 's32[2]{0}', space=sflag, size = 0x8, scoped, tag = 'scoped memory for tpu_custom_call.1']
    %10 = vsyncpa [#allocation4], 0
    %s11 = scalar_lea.sflag [#allocation4], 1
    %12 = vsyncpa %s11, 0
    %13 = vsyncpa [#allocation7], 0
    %s14 = scalar_lea.sflag [#allocation7], 1
    %15 = vsyncpa %s14, 0
    %16 = vsyncpa [#allocation5], 0
    %s17 = scalar_lea.sflag [#allocation5], 1
    %18 = vsyncpa %s17, 0
    %19 = vsyncpa [#allocation11], 0
    %s20 = scalar_lea.sflag [#allocation11], 1
    %21 = vsyncpa %s20, 0
    loop: start=0, step=1, limit=6
    $region2: #{tpu_custom_call.1} parent=1 // loop_pre_header
      _
    $region3: #{tpu_custom_call.1} parent=1 // loop_header
      %s23 = sphi 0, %s27
      %p24 = scmp.ge.s32.totalorder %s23, 6
      %s30 = sphi 0, %s49
      %s31 = sphi 0, %s45
      %s32 = sphi 0, %s41
      %s33 = sphi 0, %s30
      %s34 = sphi 0, %s31
      %s35 = sphi 0, %s32
      %s36 = sphi 0, %s33
      %s37 = sphi 0, %s34
      %s38 = sphi 0, %s35
      %s56 = sphi 0, %s58
      %s59 = sphi 0, %s56
      %s60 = sphi 0, %s59
      %s76 = sphi 0, %s60
      %s84 = sphi 0, %s86
      %s87 = sphi 0, %s84
      %s88 = sphi 0, %s87
      %s104 = sphi 0, %s88
      %s112 = sphi 0, %s114
      %s115 = sphi 0, %s112
      %s116 = sphi 0, %s115
      %s132 = sphi 0, %s116
      %s140 = sphi 0, %s142
      %s143 = sphi 0, %s140
      %s144 = sphi 0, %s143
      %s160 = sphi 0, %s144
      %s168 = sphi 0, %s170
      %s171 = sphi 0, %s168
      %s172 = sphi 0, %s171
      %s188 = sphi 0, %s172
    $region4: #{tpu_custom_call.1} parent=1 // loop_header_branch
      %26 = sbr.rel (%p24) target = $region8
    $region5: #{tpu_custom_call.1} parent=1 // loop_body
      %s28 = ssub.s32 %s23, 1
      %s29 = ssub.s32 %s23, 2
      %s39 = sadd.s32 1, %s32
      %p40 = scmp.ge.s32.totalorder %s39, 2
      %s41 = scalar_select %p40, 0, %s39
      %s42 = sadd.s32 1, %s31
      %s43 = scalar_select %p40, %s42, %s31
      %p44 = scmp.ge.s32.totalorder %s43, 1
      %s45 = scalar_select %p44, 0, %s43
      %s46 = sadd.s32 1, %s30
      %s47 = scalar_select %p44, %s46, %s30
      %p48 = scmp.ge.s32.totalorder %s47, 2
      %s49 = scalar_select %p48, 0, %s47
      %s50 = ssub.s32 %s30, %s49
      %s51 = ssub.s32 %s32, %s41
      %s52 = sor.u32 %s50, %s51
      %s53 = ssub.s32 %s31, %s45
      %s54 = sor.u32 %s52, %s53
      %p55 = scmp.eq.s32.totalorder %s54, 0
      %s57 = sadd.s32 %s56, 1
      %s58 = scalar_select %p55, %s56, %s57
      %p61 = pneg %p55
      %p62 = scmp.eq.s32.totalorder %s23, 3
      %p63 = por %p61, %p62
      %p64 = scmp.ne.s32.totalorder %s56, %s59
      %p65 = scmp.eq.s32.totalorder %s23, 0
      %p66 = por %p64, %p65
      %p67 = scmp.ne.s32.totalorder %s56, %s59
      %p68 = scmp.eq.s32.totalorder %s28, 3
      %p69 = por %p67, %p68
      %p70 = scmp.ne.s32.totalorder %s59, %s60
      %p71 = scmp.eq.s32.totalorder %s28, 0
      %p72 = por %p70, %p71
      %p73 = scmp.ne.s32.totalorder %s59, %s60
      %p74 = scmp.eq.s32.totalorder %s29, 3
      %p75 = por %p73, %p74
      %p77 = scmp.ne.s32.totalorder %s60, %s76
      %p78 = scmp.eq.s32.totalorder %s29, 0
      %p79 = por %p77, %p78
      %s80 = ssub.s32 %s30, %s49
      %s81 = ssub.s32 %s31, %s45
      %s82 = sor.u32 %s80, %s81
      %p83 = scmp.eq.s32.totalorder %s82, 0
      %s85 = sadd.s32 %s84, 1
      %s86 = scalar_select %p83, %s84, %s85
      %p89 = pneg %p83
      %p90 = scmp.eq.s32.totalorder %s23, 3
      %p91 = por %p89, %p90
      %p92 = scmp.ne.s32.totalorder %s84, %s87
      %p93 = scmp.eq.s32.totalorder %s23, 0
      %p94 = por %p92, %p93
      %p95 = scmp.ne.s32.totalorder %s84, %s87
      %p96 = scmp.eq.s32.totalorder %s28, 3
      %p97 = por %p95, %p96
      %p98 = scmp.ne.s32.totalorder %s87, %s88
      %p99 = scmp.eq.s32.totalorder %s28, 0
      %p100 = por %p98, %p99
      %p101 = scmp.ne.s32.totalorder %s87, %s88
      %p102 = scmp.eq.s32.totalorder %s29, 3
      %p103 = por %p101, %p102
      %p105 = scmp.ne.s32.totalorder %s88, %s104
      %p106 = scmp.eq.s32.totalorder %s29, 0
      %p107 = por %p105, %p106
      %s108 = ssub.s32 %s30, %s49
      %s109 = ssub.s32 %s31, %s45
      %s110 = sor.u32 %s108, %s109
      %p111 = scmp.eq.s32.totalorder %s110, 0
      %s113 = sadd.s32 %s112, 1
      %s114 = scalar_select %p111, %s112, %s113
      %p117 = pneg %p111
      %p118 = scmp.eq.s32.totalorder %s23, 3
      %p119 = por %p117, %p118
      %p120 = scmp.ne.s32.totalorder %s112, %s115
      %p121 = scmp.eq.s32.totalorder %s23, 0
      %p122 = por %p120, %p121
      %p123 = scmp.ne.s32.totalorder %s112, %s115
      %p124 = scmp.eq.s32.totalorder %s28, 3
      %p125 = por %p123, %p124
      %p126 = scmp.ne.s32.totalorder %s115, %s116
      %p127 = scmp.eq.s32.totalorder %s28, 0
      %p128 = por %p126, %p127
      %p129 = scmp.ne.s32.totalorder %s115, %s116
      %p130 = scmp.eq.s32.totalorder %s29, 3
      %p131 = por %p129, %p130
      %p133 = scmp.ne.s32.totalorder %s116, %s132
      %p134 = scmp.eq.s32.totalorder %s29, 0
      %p135 = por %p133, %p134
      %s136 = ssub.s32 %s30, %s49
      %s137 = ssub.s32 %s31, %s45
      %s138 = sor.u32 %s136, %s137
      %p139 = scmp.eq.s32.totalorder %s138, 0
      %s141 = sadd.s32 %s140, 1
      %s142 = scalar_select %p139, %s140, %s141
      %p145 = pneg %p139
      %p146 = scmp.eq.s32.totalorder %s23, 3
      %p147 = por %p145, %p146
      %p148 = scmp.ne.s32.totalorder %s140, %s143
      %p149 = scmp.eq.s32.totalorder %s23, 0
      %p150 = por %p148, %p149
      %p151 = scmp.ne.s32.totalorder %s140, %s143
      %p152 = scmp.eq.s32.totalorder %s28, 3
      %p153 = por %p151, %p152
      %p154 = scmp.ne.s32.totalorder %s143, %s144
      %p155 = scmp.eq.s32.totalorder %s28, 0
      %p156 = por %p154, %p155
      %p157 = scmp.ne.s32.totalorder %s143, %s144
      %p158 = scmp.eq.s32.totalorder %s29, 3
      %p159 = por %p157, %p158
      %p161 = scmp.ne.s32.totalorder %s144, %s160
      %p162 = scmp.eq.s32.totalorder %s29, 0
      %p163 = por %p161, %p162
      %s164 = ssub.s32 %s30, %s49
      %s165 = ssub.s32 %s31, %s45
      %s166 = sor.u32 %s164, %s165
      %p167 = scmp.eq.s32.totalorder %s166, 0
      %s169 = sadd.s32 %s168, 1
      %s170 = scalar_select %p167, %s168, %s169
      %p173 = pneg %p167
      %p174 = scmp.eq.s32.totalorder %s23, 3
      %p175 = por %p173, %p174
      %p176 = scmp.ne.s32.totalorder %s168, %s171
      %p177 = scmp.eq.s32.totalorder %s23, 0
      %p178 = por %p176, %p177
      %p179 = scmp.ne.s32.totalorder %s168, %s171
      %p180 = scmp.eq.s32.totalorder %s28, 3
      %p181 = por %p179, %p180
      %p182 = scmp.ne.s32.totalorder %s171, %s172
      %p183 = scmp.eq.s32.totalorder %s28, 0
      %p184 = por %p182, %p183
      %p185 = scmp.ne.s32.totalorder %s171, %s172
      %p186 = scmp.eq.s32.totalorder %s29, 3
      %p187 = por %p185, %p186
      %p189 = scmp.ne.s32.totalorder %s172, %s188
      %p190 = scmp.eq.s32.totalorder %s29, 0
      %p191 = por %p189, %p190
      %p192 = scmp.le.s32.totalorder 1, %s23
      %p193 = scmp.lt.s32.totalorder %s23, 5
      %p194 = pnand %p192, %p193
      %p195 = pneg %p194
      // Predicated region
      $region9: #{tpu_custom_call.1} parent=5 // pred_check
        _
      $region10: #{tpu_custom_call.1} parent=5 // pred_check_branch
        %197 = sbr.rel (%p194) target = $region12
      $region11: #{tpu_custom_call.1} parent=5 // pred_region
        %s198 = ssub.s32 %s23, 1
      $region12: #{tpu_custom_call.1} parent=5 // pred_fallthru
        _
      %p199 = scmp.lt.s32.totalorder %s23, 4
      // Predicated region
      $region13: #{tpu_custom_call.1} parent=5 // pred_check
        %p200 = pneg %p199
      $region14: #{tpu_custom_call.1} parent=5 // pred_check_branch
        %202 = sbr.rel (%p200) target = $region16
      $region15: #{tpu_custom_call.1} parent=5 // pred_region
        // Predicated region
        $region17: #{tpu_custom_call.1} parent=15 // pred_check
          %p203 = pneg %p66
        $region18: #{tpu_custom_call.1} parent=15 // pred_check_branch
          %205 = sbr.rel (%p203) target = $region20
        $region19: #{tpu_custom_call.1} parent=15 // pred_region
          %s206 = sand.u32 %s56, 1
          %s207 = scalar_lea.sflag [#allocation4], %s206
          %s208 = sand.u32 %s56, 1
          %s209 = smul.addr %s208, 64
          %s210 = scalar_lea.vmem [#allocation3], %s209
          %s211 = smul.u32 8, %s32
          %s213 = ssub.s32 1024, 1024
          %214 = vsyncadd %s207, %s213
          %s215 = sadd.s32 %s31, %s211
          %s216 = smul.addr %s30, 16
          %s217 = sadd.s32 %s215, %s216
          %s218 = smul.addr %s217, 128
          %s219 = scalar_lea.hbm %s0, %s218
          %s220 = sshll.u32 %s210, 4
          %s221 = int_to_ptr.vmem [resolvable:$true] %s220
          %226 = dma.hbm_to_vmem [thread:$0]  %s219, 1024, %s221, %s207, 128, 128, 8
        $region20: #{tpu_custom_call.1} parent=15 // pred_fallthru
          _
        // Predicated region
        $region21: #{tpu_custom_call.1} parent=15 // pred_check
          %p227 = pneg %p94
        $region22: #{tpu_custom_call.1} parent=15 // pred_check_branch
          %229 = sbr.rel (%p227) target = $region24
        $region23: #{tpu_custom_call.1} parent=15 // pred_region
          %s230 = sand.u32 %s23, 1
          %s231 = scalar_lea.sflag [#allocation7], %s230
          %s232 = sand.u32 %s84, 1
          %s233 = smul.addr %s232, 8
          %s234 = scalar_lea.vmem [#allocation6], %s233
          %s236 = ssub.s32 128, 128
          %237 = vsyncadd %s231, %s236
          %s238 = sadd.s32 %s31, %s30
          %s239 = smul.addr %s238, 128
          %s240 = scalar_lea.hbm %s1, %s239
          %s242 = sshll.u32 %s234, 4
          %s243 = int_to_ptr.vmem [resolvable:$true] %s242
          %245 = dma.hbm_to_vmem [thread:$0]  %s240, 128, %s243, %s231
        $region24: #{tpu_custom_call.1} parent=15 // pred_fallthru
          _
        // Predicated region
        $region25: #{tpu_custom_call.1} parent=15 // pred_check
          %p246 = pneg %p122
        $region26: #{tpu_custom_call.1} parent=15 // pred_check_branch
          %248 = sbr.rel (%p246) target = $region28
        $region27: #{tpu_custom_call.1} parent=15 // pred_region
          %s249 = sand.u32 %s23, 1
          %s250 = scalar_lea.sflag [#allocation7], %s249
          %s251 = sand.u32 %s112, 1
          %s252 = smul.addr %s251, 8
          %s253 = scalar_lea.vmem [#allocation8], %s252
          %s255 = ssub.s32 128, 128
          %256 = vsyncadd %s250, %s255
          %s257 = sadd.s32 %s31, %s30
          %s258 = smul.addr %s257, 128
          %s259 = scalar_lea.hbm %s2, %s258
          %s261 = sshll.u32 %s253, 4
          %s262 = int_to_ptr.vmem [resolvable:$true] %s261
          %264 = dma.hbm_to_vmem [thread:$0]  %s259, 128, %s262, %s250
        $region28: #{tpu_custom_call.1} parent=15 // pred_fallthru
          _
      $region16: #{tpu_custom_call.1} parent=5 // pred_fallthru
        _
      %p265 = scmp.le.s32.totalorder 1, %s23
      %p266 = scmp.lt.s32.totalorder %s23, 5
      %p267 = pnand %p265, %p266
      %p268 = pneg %p267
      // Predicated region
      $region29: #{tpu_custom_call.1} parent=5 // pred_check
        _
      $region30: #{tpu_custom_call.1} parent=5 // pred_check_branch
        %270 = sbr.rel (%p267) target = $region32
      $region31: #{tpu_custom_call.1} parent=5 // pred_region
        %s271 = ssub.s32 %s23, 1
        %s272 = sand.u32 %s59, 1
        %s273 = scalar_lea.sflag [#allocation4], %s272
        %s274 = sand.u32 %s59, 1
        %s275 = smul.addr %s274, 64
        %s276 = scalar_lea.vmem [#allocation3], %s275
        // Predicated region
        $region33: #{tpu_custom_call.1} parent=31 // pred_check
          %p277 = pneg %p72
        $region34: #{tpu_custom_call.1} parent=31 // pred_check_branch
          %279 = sbr.rel (%p277) target = $region36
        $region35: #{tpu_custom_call.1} parent=31 // pred_region
          %280 = dma.done %s273, 1024
        $region36: #{tpu_custom_call.1} parent=31 // pred_fallthru
          _
        %s281 = sand.u32 %s28, 1
        %s282 = scalar_lea.sflag [#allocation7], %s281
        %s283 = sand.u32 %s87, 1
        %s284 = smul.addr %s283, 8
        %s285 = scalar_lea.vmem [#allocation6], %s284
        // Predicated region
        $region37: #{tpu_custom_call.1} parent=31 // pred_check
          %p286 = pneg %p100
        $region38: #{tpu_custom_call.1} parent=31 // pred_check_branch
          %288 = sbr.rel (%p286) target = $region40
        $region39: #{tpu_custom_call.1} parent=31 // pred_region
          %289 = dma.done %s282, 128
        $region40: #{tpu_custom_call.1} parent=31 // pred_fallthru
          _
        %s290 = sand.u32 %s28, 1
        %s291 = scalar_lea.sflag [#allocation7], %s290
        %s292 = sand.u32 %s115, 1
        %s293 = smul.addr %s292, 8
        %s294 = scalar_lea.vmem [#allocation8], %s293
        // Predicated region
        $region41: #{tpu_custom_call.1} parent=31 // pred_check
          %p295 = pneg %p128
        $region42: #{tpu_custom_call.1} parent=31 // pred_check_branch
          %297 = sbr.rel (%p295) target = $region44
        $region43: #{tpu_custom_call.1} parent=31 // pred_region
          %298 = dma.done %s291, 128
        $region44: #{tpu_custom_call.1} parent=31 // pred_fallthru
          _
        %s299 = sand.u32 %s59, 1
        %s300 = scalar_lea.sflag [#allocation4], %s299
        %s301 = sand.u32 %s59, 1
        %s302 = smul.addr %s301, 64
        %s303 = scalar_lea.vmem [#allocation3], %s302
        %p304 = pneg %p72
        %p305 = pneg %p69
        %s306 = sand.u32 %s28, 1
        %s307 = scalar_lea.sflag [#allocation7], %s306
        %s308 = sand.u32 %s87, 1
        %s309 = smul.addr %s308, 8
        %s310 = scalar_lea.vmem [#allocation6], %s309
        %p311 = pneg %p100
        %p312 = pneg %p97
        %s313 = sand.u32 %s28, 1
        %s314 = scalar_lea.sflag [#allocation7], %s313
        %s315 = sand.u32 %s115, 1
        %s316 = smul.addr %s315, 8
        %s317 = scalar_lea.vmem [#allocation8], %s316
        %p318 = pneg %p128
        %p319 = pneg %p125
        %p320 = pneg %p156
        %p321 = pneg %p153
        %s322 = sand.u32 %s143, 1
        %s323 = scalar_lea.sflag [#allocation5], %s322
        %s324 = sand.u32 %s143, 1
        %s325 = scalar_lea.vmem [#allocation9], %s324
        %p326 = pneg %p184
        %p327 = pneg %p181
        %s328 = sand.u32 %s171, 1
        %s329 = scalar_lea.sflag [#allocation11], %s328
        %s330 = sand.u32 %s171, 1
        %s331 = scalar_lea.vmem [#allocation10], %s330
        %s332 = smul.u32 8, %s35
        %v333 = vld [vmem:[%s294] sm:$0xff]
        %p334 = scmp.eq.s32.totalorder %s35, 0
        // Predicated region
        $region45: #{tpu_custom_call.1} parent=31 // pred_check
          %p335 = pneg %p334
        $region46: #{tpu_custom_call.1} parent=31 // pred_check_branch
          %337 = sbr.rel (%p335) target = $region48
        $region47: #{tpu_custom_call.1} parent=31 // pred_region
          %338 = vst [vmem:[#allocation2] sm:$0xff] 0.0
          %v339 = vld [vmem:[%s285] sm:$0xff]
          %v340 = vsub.f32 %v339, %v333
          %v341 = vmul.f32 %v340, %v340
          %v342 = vrot.slane %v341, 4
          %v343 = vadd.f32 %v341, %v342
          %v344 = vrot.slane %v343, 2
          %v345 = vadd.f32 %v343, %v344
          %v346 = vrot.slane %v345, 1
          %v347 = vadd.f32 %v345, %v346
          %348 = vst [vmem:[%s331] sm:$0x1] %v347
        $region48: #{tpu_custom_call.1} parent=31 // pred_fallthru
          _
        %v349 = vld [vmem:[%s276] sm:$0xff]
        %v350 = vsub.f32 %v349, %v333
        %v351 = vmul.f32 %v350, %v350
        %s352 = scalar_lea.vmem %s276, 8 [#allocation3]
        %v353 = vld [vmem:[%s352] sm:$0xff]
        %v354 = vsub.f32 %v353, %v333
        %v355 = vmul.f32 %v354, %v354
        %v356 = vadd.f32 %v351, %v355
        %s357 = scalar_lea.vmem %s276, 16 [#allocation3]
        %v358 = vld [vmem:[%s357] sm:$0xff]
        %v359 = vsub.f32 %v358, %v333
        %v360 = vmul.f32 %v359, %v359
        %v361 = vadd.f32 %v356, %v360
        %s362 = scalar_lea.vmem %s276, 24 [#allocation3]
        %v363 = vld [vmem:[%s362] sm:$0xff]
        %v364 = vsub.f32 %v363, %v333
        %v365 = vmul.f32 %v364, %v364
        %v366 = vadd.f32 %v361, %v365
        %s367 = scalar_lea.vmem %s276, 32 [#allocation3]
        %v368 = vld [vmem:[%s367] sm:$0xff]
        %v369 = vsub.f32 %v368, %v333
        %v370 = vmul.f32 %v369, %v369
        %v371 = vadd.f32 %v366, %v370
        %s372 = scalar_lea.vmem %s276, 40 [#allocation3]
        %v373 = vld [vmem:[%s372] sm:$0xff]
        %v374 = vsub.f32 %v373, %v333
        %v375 = vmul.f32 %v374, %v374
        %v376 = vadd.f32 %v371, %v375
        %s377 = scalar_lea.vmem %s276, 48 [#allocation3]
        %v378 = vld [vmem:[%s377] sm:$0xff]
        %v379 = vsub.f32 %v378, %v333
        %v380 = vmul.f32 %v379, %v379
        %v381 = vadd.f32 %v376, %v380
        %s382 = scalar_lea.vmem %s276, 56 [#allocation3]
        %v383 = vld [vmem:[%s382] sm:$0xff]
        %v384 = vsub.f32 %v383, %v333
        %v385 = vmul.f32 %v384, %v384
        %v386 = vadd.f32 %v381, %v385
        %v387 = vld [vmem:[#allocation2] sm:$0xff]
        %v388 = vadd.f32 %v387, %v386
        %389 = vst [vmem:[#allocation2] sm:$0xff] %v388
        %p390 = scmp.eq.s32.totalorder %s35, 1
        // Predicated region
        $region49: #{tpu_custom_call.1} parent=31 // pred_check
          %p391 = pneg %p390
        $region50: #{tpu_custom_call.1} parent=31 // pred_check_branch
          %393 = sbr.rel (%p391) target = $region52
        $region51: #{tpu_custom_call.1} parent=31 // pred_region
          %v394 = vld [vmem:[#allocation2] sm:$0xff]
          %v395 = vrot.slane %v394, 4
          %v396 = vadd.f32 %v394, %v395
          %v397 = vrot.slane %v396, 2
          %v398 = vadd.f32 %v396, %v397
          %v399 = vrot.slane %v398, 1
          %v400 = vadd.f32 %v398, %v399
          %401 = vst [vmem:[%s325] sm:$0x1] %v400
        $region52: #{tpu_custom_call.1} parent=31 // pred_fallthru
          _
        %s402 = sand.u32 %s143, 1
        %s403 = scalar_lea.sflag [#allocation5], %s402
        %s404 = sand.u32 %s143, 1
        %s405 = scalar_lea.vmem [#allocation9], %s404
        %s406 = sand.u32 %s171, 1
        %s407 = scalar_lea.sflag [#allocation11], %s406
        %s408 = sand.u32 %s171, 1
        %s409 = scalar_lea.vmem [#allocation10], %s408
        // Predicated region
        $region53: #{tpu_custom_call.1} parent=31 // pred_check
          %p410 = pneg %p153
        $region54: #{tpu_custom_call.1} parent=31 // pred_check_branch
          %412 = sbr.rel (%p410) target = $region56
        $region55: #{tpu_custom_call.1} parent=31 // pred_region
          %s414 = ssub.s32 16, 16
          %415 = vsyncadd %s403, %s414
          %s416 = sadd.s32 %s34, %s33
          %s417 = smul.addr %s416, 16
          %s418 = scalar_lea.hbm %s3, %s417
          %s420 = sshll.u32 %s405, 4
          %s421 = int_to_ptr.vmem [resolvable:$true] %s420
          %423 = dma.vmem_to_hbm [thread:$0]  %s421, 16, %s418, %s403
        $region56: #{tpu_custom_call.1} parent=31 // pred_fallthru
          _
        // Predicated region
        $region57: #{tpu_custom_call.1} parent=31 // pred_check
          %p424 = pneg %p181
        $region58: #{tpu_custom_call.1} parent=31 // pred_check_branch
          %426 = sbr.rel (%p424) target = $region60
        $region59: #{tpu_custom_call.1} parent=31 // pred_region
          %s428 = ssub.s32 16, 16
          %429 = vsyncadd %s407, %s428
          %s430 = sadd.s32 %s34, %s33
          %s431 = smul.addr %s430, 16
          %s432 = scalar_lea.hbm %s4, %s431
          %s434 = sshll.u32 %s409, 4
          %s435 = int_to_ptr.vmem [resolvable:$true] %s434
          %437 = dma.vmem_to_hbm [thread:$0]  %s435, 16, %s432, %s407
        $region60: #{tpu_custom_call.1} parent=31 // pred_fallthru
          _
      $region32: #{tpu_custom_call.1} parent=5 // pred_fallthru
        _
      %p438 = scmp.le.s32.totalorder 2, %s23
      // Predicated region
      $region61: #{tpu_custom_call.1} parent=5 // pred_check
        %p439 = pneg %p438
      $region62: #{tpu_custom_call.1} parent=5 // pred_check_branch
        %441 = sbr.rel (%p439) target = $region64
      $region63: #{tpu_custom_call.1} parent=5 // pred_region
        %s442 = ssub.s32 %s23, 2
        // Predicated region
        $region65: #{tpu_custom_call.1} parent=63 // pred_check
          %p443 = pneg %p159
        $region66: #{tpu_custom_call.1} parent=63 // pred_check_branch
          %445 = sbr.rel (%p443) target = $region68
        $region67: #{tpu_custom_call.1} parent=63 // pred_region
          %s446 = sand.u32 %s144, 1
          %s447 = scalar_lea.sflag [#allocation5], %s446
          %s448 = sand.u32 %s144, 1
          %s449 = scalar_lea.vmem [#allocation9], %s448
          %450 = dma.done %s447, 16
        $region68: #{tpu_custom_call.1} parent=63 // pred_fallthru
          _
        // Predicated region
        $region69: #{tpu_custom_call.1} parent=63 // pred_check
          %p451 = pneg %p187
        $region70: #{tpu_custom_call.1} parent=63 // pred_check_branch
          %453 = sbr.rel (%p451) target = $region72
        $region71: #{tpu_custom_call.1} parent=63 // pred_region
          %s454 = sand.u32 %s172, 1
          %s455 = scalar_lea.sflag [#allocation11], %s454
          %s456 = sand.u32 %s172, 1
          %s457 = scalar_lea.vmem [#allocation10], %s456
          %458 = dma.done %s455, 16
        $region72: #{tpu_custom_call.1} parent=63 // pred_fallthru
          _
      $region64: #{tpu_custom_call.1} parent=5 // pred_fallthru
        _
    $region6: #{tpu_custom_call.1} parent=1 // loop_footer
      %s27 = sadd.s32 1, %s23
    $region7: #{tpu_custom_call.1} parent=1 // loop_footer_branch
      %22 = sbr.rel target = $region3
    $region8: #{tpu_custom_call.1} parent=1 // loop_exit
      _
    %459 = vsyncpa [#allocation4], 1
    %s460 = scalar_lea.sflag [#allocation4], 1
    %461 = vsyncpa %s460, 1
    %462 = vsyncpa [#allocation7], 1
    %s463 = scalar_lea.sflag [#allocation7], 1
    %464 = vsyncpa %s463, 1
    %465 = vsyncpa [#allocation5], 1
    %s466 = scalar_lea.sflag [#allocation5], 1
    %467 = vsyncpa %s466, 1
    %468 = vsyncpa [#allocation11], 1
    %s469 = scalar_lea.sflag [#allocation11], 1
    %470 = vsyncpa %s469, 1

</llo_original>
